<compile_context>
chip_gen: v7x
topology: tpu7x:2x2x1
jax: 0.10.0
libtpu: 0.0.40
codegen_flags: <defaults>
</compile_context>

<pallas_src>
import jax
import jax.numpy as jnp
from jax.experimental import pallas as pl
from jax.experimental.pallas import tpu as pltpu


def _mlp_kernel(x_ref, w1_ref, b1_ref, w2_ref, b2_ref, w3_ref, b3_ref, o_ref):
    # MXU operands in bf16, f32 accumulation; bias add + ReLU stay f32 (VPU).
    x = x_ref[...].astype(jnp.bfloat16)

    h1 = jnp.dot(x, w1_ref[...], preferred_element_type=jnp.float32)
    h1 = jnp.maximum(h1 + b1_ref[...], 0.0)

    h2 = jnp.dot(h1.astype(jnp.bfloat16), w2_ref[...],
                 preferred_element_type=jnp.float32)
    h2 = jnp.maximum(h2 + b2_ref[...], 0.0)

    out = jnp.dot(h2.astype(jnp.bfloat16), w3_ref[...],
                  preferred_element_type=jnp.float32)
    o_ref[...] = (out + b3_ref[...]).astype(o_ref.dtype)


def _round_up(n, m):
    return ((n + m - 1) // m) * m


def meta_net_dnn_forward(x, var, *, block_batch=2048):
    """Pallas equivalent of meta_Net_DNN.forward(x, var).

    var = [W1, b1, W2, b2, W3, b3] with PyTorch nn.Linear conventions:
      Wk: (out_features, in_features), bk: (out_features,)
    """
    w1, b1, w2, b2, w3, b3 = var
    batch, state_size = x.shape
    hidden1 = w1.shape[0]
    hidden2 = w2.shape[0]
    action_size = w3.shape[0]

    # --- Batch tile selection -------------------------------------------------
    # Multiple of 8 (sublane), capped by block_batch, and capped at half the
    # padded batch so the grid keeps >=2 steps (lets "parallel" shard across
    # both TensorCores on v7x; harmless elsewhere).
    padded8 = _round_up(batch, 8)
    tb = min(block_batch, padded8)
    if padded8 >= 16:
        tb = min(tb, padded8 // 2)
    tb = max(8, (tb // 8) * 8)

    padded_batch = _round_up(batch, tb)
    if padded_batch != batch:
        x = jnp.pad(x, ((0, padded_batch - batch), (0, 0)))

    # --- One-time weight prep (wrapper side, tiny matrices) -------------------
    # Pre-transpose to (in, out) so the kernel does plain x @ W (no per-step
    # XLU transpose of the VMEM-resident weights); bf16 halves weight DMA.
    w1t = w1.T.astype(jnp.bfloat16)          # (state_size, hidden1)
    w2t = w2.T.astype(jnp.bfloat16)          # (hidden1, hidden2)
    w3t = w3.T.astype(jnp.bfloat16)          # (hidden2, action_size)
    b1r = b1.reshape(1, hidden1).astype(jnp.float32)
    b2r = b2.reshape(1, hidden2).astype(jnp.float32)
    b3r = b3.reshape(1, action_size).astype(jnp.float32)

    grid = (padded_batch // tb,)
    const = lambda i: (0, 0)  # same block every step -> stays VMEM-resident

    out_padded = pl.pallas_call(
        _mlp_kernel,
        out_shape=jax.ShapeDtypeStruct((padded_batch, action_size), x.dtype),
        grid=grid,
        in_specs=[
            pl.BlockSpec((tb, state_size), lambda i: (i, 0)),   # x tile
            pl.BlockSpec((state_size, hidden1), const),         # W1^T
            pl.BlockSpec((1, hidden1), const),                  # b1
            pl.BlockSpec((hidden1, hidden2), const),            # W2^T
            pl.BlockSpec((1, hidden2), const),                  # b2
            pl.BlockSpec((hidden2, action_size), const),        # W3^T
            pl.BlockSpec((1, action_size), const),              # b3
        ],
        # Unpadded output block: last dim equals full array dim (legal) and
        # keeps HBM writeback at action_size columns instead of 128.
        out_specs=pl.BlockSpec((tb, action_size), lambda i: (i, 0)),
        compiler_params=pltpu.CompilerParams(
            dimension_semantics=("parallel",)),
    )(x, w1t, b1r, w2t, b2r, w3t, b3r)

    return out_padded[:batch]


def _reference_forward(x, var):
    w1, b1, w2, b2, w3, b3 = var
    h = jax.nn.relu(x @ w1.T + b1)
    h = jax.nn.relu(h @ w2.T + b2)
    return h @ w3.T + b3


if __name__ == "__main__":
    # Small, deterministic shapes consistent with the module's forward pass.
    state_size = 16
    hidden1 = 32
    hidden2 = 32
    action_size = 8

    key = jax.random.PRNGKey(0)
    kx, k1, k2, k3, k4, k5, k6 = jax.random.split(key, 7)

    # nn.Linear-style parameter shapes.
    var = [
        jax.random.normal(k1, (hidden1, state_size), dtype=jnp.float32) * 0.1,   # W1
        jax.random.normal(k2, (hidden1,), dtype=jnp.float32) * 0.1,              # b1
        jax.random.normal(k3, (hidden2, hidden1), dtype=jnp.float32) * 0.1,      # W2
        jax.random.normal(k4, (hidden2,), dtype=jnp.float32) * 0.1,              # b2
        jax.random.normal(k5, (action_size, hidden2), dtype=jnp.float32) * 0.1,  # W3
        jax.random.normal(k6, (action_size,), dtype=jnp.float32) * 0.1,          # b3
    ]

    # Case 1: default (large) block_batch -> tile capped at half the batch,
    # grid of 2 steps (exercises megacore-friendly tiling + pipelining).
    x64 = jax.random.normal(kx, (64, state_size), dtype=jnp.float32)
    out = jax.block_until_ready(meta_net_dnn_forward(x64, var))
    ref = _reference_forward(x64, var)
    assert out.shape == (64, action_size)
    # bf16 MXU operands with f32 accumulation -> relaxed tolerance vs f32 ref.
    assert jnp.allclose(out, ref, atol=2e-2, rtol=2e-2), "mismatch vs reference (batch=64)"

    # Case 2: small explicit block_batch -> multi-step grid.
    out_b = jax.block_until_ready(meta_net_dnn_forward(x64, var, block_batch=16))
    assert out_b.shape == (64, action_size)
    assert jnp.allclose(out_b, ref, atol=2e-2, rtol=2e-2), "mismatch vs reference (tb=16)"

    # Case 3: ragged batch + non-multiple-of-8 block_batch (exercises batch
    # padding, tile rounding to a multiple of 8, and output slicing).
    x10 = jax.random.normal(kx, (10, state_size), dtype=jnp.float32)
    out2 = jax.block_until_ready(meta_net_dnn_forward(x10, var, block_batch=10))
    ref2 = _reference_forward(x10, var)
    assert out2.shape == (10, action_size)
    assert jnp.allclose(out2, ref2, atol=2e-2, rtol=2e-2), "mismatch vs reference (batch=10)"

    print("KERNEL_OK")
</pallas_src>

<mosaic_0001>
module attributes {stable_mosaic.version = 11 : i64} {
  func.func @_mlp_kernel(%arg0: i32, %arg1: memref<32x16xf32, #tpu.memory_space<vmem>>, %arg2: memref<16x32xbf16, #tpu.memory_space<vmem>>, %arg3: memref<1x32xf32, #tpu.memory_space<vmem>>, %arg4: memref<32x32xbf16, #tpu.memory_space<vmem>>, %arg5: memref<1x32xf32, #tpu.memory_space<vmem>>, %arg6: memref<32x8xbf16, #tpu.memory_space<vmem>>, %arg7: memref<1x8xf32, #tpu.memory_space<vmem>>, %arg8: memref<32x8xf32, #tpu.memory_space<vmem>>) attributes {dimension_semantics = [#tpu.dimension_semantics<parallel>], iteration_bounds = array<i64: 2>, scalar_prefetch = 0 : i64, scratch_operands = 0 : i64, tpu.core_type = #tpu.core_type<tc>, window_params = [{transform_indices = @transform_0, window_bounds = array<i64: 32, 16>}, {pipeline_mode = #tpu.pipeline_mode<synchronous>, transform_indices = @transform_1, window_bounds = array<i64: 16, 32>}, {pipeline_mode = #tpu.pipeline_mode<synchronous>, transform_indices = @transform_2, window_bounds = array<i64: 1, 32>}, {pipeline_mode = #tpu.pipeline_mode<synchronous>, transform_indices = @transform_3, window_bounds = array<i64: 32, 32>}, {pipeline_mode = #tpu.pipeline_mode<synchronous>, transform_indices = @transform_4, window_bounds = array<i64: 1, 32>}, {pipeline_mode = #tpu.pipeline_mode<synchronous>, transform_indices = @transform_5, window_bounds = array<i64: 32, 8>}, {pipeline_mode = #tpu.pipeline_mode<synchronous>, transform_indices = @transform_6, window_bounds = array<i64: 1, 8>}, {transform_indices = @transform_7, window_bounds = array<i64: 32, 8>}]} {
    %c0 = arith.constant 0 : index
    %c0_0 = arith.constant 0 : index
    %0 = vector.load %arg1[%c0, %c0_0] : memref<32x16xf32, #tpu.memory_space<vmem>>, vector<32x16xf32>
    %1 = arith.truncf %0 : vector<32x16xf32> to vector<32x16xbf16>
    %c0_1 = arith.constant 0 : index
    %c0_2 = arith.constant 0 : index
    %2 = vector.load %arg2[%c0_1, %c0_2] : memref<16x32xbf16, #tpu.memory_space<vmem>>, vector<16x32xbf16>
    %cst = arith.constant dense<0.000000e+00> : vector<32x32xf32>
    %3 = tpu.matmul %1, %2, %cst {dimension_numbers = #tpu.dot_dimension_numbers<[1], [0], [0], [1], [0, 0, 1, 1], [], []>} : vector<32x16xbf16>, vector<16x32xbf16>, vector<32x32xf32> -> vector<32x32xf32>
    %c0_3 = arith.constant 0 : index
    %c0_4 = arith.constant 0 : index
    %4 = vector.load %arg3[%c0_3, %c0_4] : memref<1x32xf32, #tpu.memory_space<vmem>>, vector<1x32xf32>
    %5 = vector.broadcast %4 : vector<1x32xf32> to vector<32x32xf32>
    %6 = arith.addf %3, %5 : vector<32x32xf32>
    %cst_5 = arith.constant 0.000000e+00 : f32
    %7 = vector.broadcast %cst_5 : f32 to vector<32x32xf32>
    %8 = arith.maximumf %6, %7 : vector<32x32xf32>
    %9 = arith.truncf %8 : vector<32x32xf32> to vector<32x32xbf16>
    %c0_6 = arith.constant 0 : index
    %c0_7 = arith.constant 0 : index
    %10 = vector.load %arg4[%c0_6, %c0_7] : memref<32x32xbf16, #tpu.memory_space<vmem>>, vector<32x32xbf16>
    %cst_8 = arith.constant dense<0.000000e+00> : vector<32x32xf32>
    %11 = tpu.matmul %9, %10, %cst_8 {dimension_numbers = #tpu.dot_dimension_numbers<[1], [0], [0], [1], [0, 0, 1, 1], [], []>} : vector<32x32xbf16>, vector<32x32xbf16>, vector<32x32xf32> -> vector<32x32xf32>
    %c0_9 = arith.constant 0 : index
    %c0_10 = arith.constant 0 : index
    %12 = vector.load %arg5[%c0_9, %c0_10] : memref<1x32xf32, #tpu.memory_space<vmem>>, vector<1x32xf32>
    %13 = vector.broadcast %12 : vector<1x32xf32> to vector<32x32xf32>
    %14 = arith.addf %11, %13 : vector<32x32xf32>
    %cst_11 = arith.constant 0.000000e+00 : f32
    %15 = vector.broadcast %cst_11 : f32 to vector<32x32xf32>
    %16 = arith.maximumf %14, %15 : vector<32x32xf32>
    %17 = arith.truncf %16 : vector<32x32xf32> to vector<32x32xbf16>
    %c0_12 = arith.constant 0 : index
    %c0_13 = arith.constant 0 : index
    %18 = vector.load %arg6[%c0_12, %c0_13] : memref<32x8xbf16, #tpu.memory_space<vmem>>, vector<32x8xbf16>
    %cst_14 = arith.constant dense<0.000000e+00> : vector<32x8xf32>
    %19 = tpu.matmul %17, %18, %cst_14 {dimension_numbers = #tpu.dot_dimension_numbers<[1], [0], [0], [1], [0, 0, 1, 1], [], []>} : vector<32x32xbf16>, vector<32x8xbf16>, vector<32x8xf32> -> vector<32x8xf32>
    %c0_15 = arith.constant 0 : index
    %c0_16 = arith.constant 0 : index
    %20 = vector.load %arg7[%c0_15, %c0_16] : memref<1x8xf32, #tpu.memory_space<vmem>>, vector<1x8xf32>
    %21 = vector.broadcast %20 : vector<1x8xf32> to vector<32x8xf32>
    %22 = arith.addf %19, %21 : vector<32x8xf32>
    %c0_17 = arith.constant 0 : index
    %c0_18 = arith.constant 0 : index
    %23 = vector.load %arg8[%c0_17, %c0_18] : memref<32x8xf32, #tpu.memory_space<vmem>>, vector<32x8xf32>
    tpu.vector_store %arg8[%c0_17, %c0_18], %22 {strides = array<i32>} : memref<32x8xf32, #tpu.memory_space<vmem>>, vector<32x8xf32>,
    return
  }
  func.func @transform_0(%arg0: i32) -> (i32, i32) {
    %c0_i32 = arith.constant 0 : i32
    %c0_i32_0 = arith.constant 0 : i32
    return %arg0, %c0_i32 : i32, i32
  }
  func.func @transform_1(%arg0: i32) -> (i32, i32) {
    %c0_i32 = arith.constant 0 : i32
    %c0_i32_0 = arith.constant 0 : i32
    %c0_i32_1 = arith.constant 0 : i32
    return %c0_i32, %c0_i32_0 : i32, i32
  }
  func.func @transform_2(%arg0: i32) -> (i32, i32) {
    %c0_i32 = arith.constant 0 : i32
    %c0_i32_0 = arith.constant 0 : i32
    %c0_i32_1 = arith.constant 0 : i32
    return %c0_i32, %c0_i32_0 : i32, i32
  }
  func.func @transform_3(%arg0: i32) -> (i32, i32) {
    %c0_i32 = arith.constant 0 : i32
    %c0_i32_0 = arith.constant 0 : i32
    %c0_i32_1 = arith.constant 0 : i32
    return %c0_i32, %c0_i32_0 : i32, i32
  }
  func.func @transform_4(%arg0: i32) -> (i32, i32) {
    %c0_i32 = arith.constant 0 : i32
    %c0_i32_0 = arith.constant 0 : i32
    %c0_i32_1 = arith.constant 0 : i32
    return %c0_i32, %c0_i32_0 : i32, i32
  }
  func.func @transform_5(%arg0: i32) -> (i32, i32) {
    %c0_i32 = arith.constant 0 : i32
    %c0_i32_0 = arith.constant 0 : i32
    %c0_i32_1 = arith.constant 0 : i32
    return %c0_i32, %c0_i32_0 : i32, i32
  }
  func.func @transform_6(%arg0: i32) -> (i32, i32) {
    %c0_i32 = arith.constant 0 : i32
    %c0_i32_0 = arith.constant 0 : i32
    %c0_i32_1 = arith.constant 0 : i32
    return %c0_i32, %c0_i32_0 : i32, i32
  }
  func.func @transform_7(%arg0: i32) -> (i32, i32) {
    %c0_i32 = arith.constant 0 : i32
    %c0_i32_0 = arith.constant 0 : i32
    return %arg0, %c0_i32 : i32, i32
  }
}

</mosaic_0001>

<llo_original>
// kernel: tpu_custom_call.1
$region0: #{tpu_custom_call.1}
  #allocation0 [shape = 'u32[]', space=smem, size = 0x4, offset = 0x4, fixed_abs, tag = 'smem constant byte address 0x4 - core index']
  #allocation1 [shape = 'u32[144,128]{1,0:T(1,128)}', space=vmem, size = 0x12000, scoped, tag = 'internal scratch']
  %s0 = inlined_call_operand.vmem [shape: f32[64,16], index: 0, kind: input, shape index: {}]
  %s1 = inlined_call_operand.vmem [shape: bf16[16,32], index: 1, kind: input, shape index: {}]
  %s2 = inlined_call_operand.vmem [shape: f32[1,32], index: 2, kind: input, shape index: {}]
  %s3 = inlined_call_operand.vmem [shape: bf16[32,32], index: 3, kind: input, shape index: {}]
  %s4 = inlined_call_operand.vmem [shape: f32[1,32], index: 4, kind: input, shape index: {}]
  %s5 = inlined_call_operand.vmem [shape: bf16[32,8], index: 5, kind: input, shape index: {}]
  %s6 = inlined_call_operand.vmem [shape: f32[1,8], index: 6, kind: input, shape index: {}]
  %s7 = inlined_call_operand.vmem [shape: f32[64,8], index: 7, kind: output, shape index: {}]
  %s8 = sld [smem:[#allocation0]]
  $region61: #{tpu_custom_call.1} parent=0
    _
  %s10 = ssub.s32 1, %s8
  %s11 = scalar_select 0, %s10, %s8
  loop: start=0, step=1, limit=4
  $region2: #{tpu_custom_call.1} parent=0 // loop_pre_header
    _
  $region3: #{tpu_custom_call.1} parent=0 // loop_header
    %s13 = sphi 0, %s17
    %p14 = scmp.ge.s32.totalorder %s13, 4
    %s23 = sphi 0, %s25
    %s26 = sphi 0, %s23
    %s27 = sphi 0, %s26
    %s43 = sphi 0, %s27
    %s47 = sphi 0, %s47
    %s49 = sphi 0, %s47
    %s50 = sphi 0, %s49
    %s64 = sphi 0, %s50
    %s68 = sphi 0, %s68
    %s70 = sphi 0, %s68
    %s71 = sphi 0, %s70
    %s85 = sphi 0, %s71
    %s89 = sphi 0, %s89
    %s91 = sphi 0, %s89
    %s92 = sphi 0, %s91
    %s106 = sphi 0, %s92
    %s110 = sphi 0, %s110
    %s112 = sphi 0, %s110
    %s113 = sphi 0, %s112
    %s127 = sphi 0, %s113
    %s131 = sphi 0, %s131
    %s133 = sphi 0, %s131
    %s134 = sphi 0, %s133
    %s148 = sphi 0, %s134
    %s152 = sphi 0, %s152
    %s154 = sphi 0, %s152
    %s155 = sphi 0, %s154
    %s169 = sphi 0, %s155
    %s175 = sphi 0, %s177
    %s178 = sphi 0, %s175
    %s179 = sphi 0, %s178
    %s195 = sphi 0, %s179
  $region4: #{tpu_custom_call.1} parent=0 // loop_header_branch
    %16 = sbr.rel (%p14) target = $region8
  $region5: #{tpu_custom_call.1} parent=0 // loop_body
    %s18 = ssub.s32 %s13, 1
    %s19 = ssub.s32 %s13, 2
    %s20 = sadd.s32 %s13, 1
    %s21 = ssub.s32 %s13, %s20
    %p22 = scmp.eq.s32.totalorder %s21, 0
    %s24 = sadd.s32 %s23, 1
    %s25 = scalar_select %p22, %s23, %s24
    %p28 = pneg %p22
    %p29 = scmp.eq.s32.totalorder %s13, 1
    %p30 = por %p28, %p29
    %p31 = scmp.ne.s32.totalorder %s23, %s26
    %p32 = scmp.eq.s32.totalorder %s13, 0
    %p33 = por %p31, %p32
    %p34 = scmp.ne.s32.totalorder %s23, %s26
    %p35 = scmp.eq.s32.totalorder %s18, 1
    %p36 = por %p34, %p35
    %p37 = scmp.ne.s32.totalorder %s26, %s27
    %p38 = scmp.eq.s32.totalorder %s18, 0
    %p39 = por %p37, %p38
    %p40 = scmp.ne.s32.totalorder %s26, %s27
    %p41 = scmp.eq.s32.totalorder %s19, 1
    %p42 = por %p40, %p41
    %p44 = scmp.ne.s32.totalorder %s27, %s43
    %p45 = scmp.eq.s32.totalorder %s19, 0
    %p46 = por %p44, %p45
    %s48 = sadd.s32 %s47, 1
    %p51 = scmp.eq.s32.totalorder %s13, 1
    %p52 = scmp.ne.s32.totalorder %s47, %s49
    %p53 = scmp.eq.s32.totalorder %s13, 0
    %p54 = por %p52, %p53
    %p55 = scmp.ne.s32.totalorder %s47, %s49
    %p56 = scmp.eq.s32.totalorder %s18, 1
    %p57 = por %p55, %p56
    %p58 = scmp.ne.s32.totalorder %s49, %s50
    %p59 = scmp.eq.s32.totalorder %s18, 0
    %p60 = por %p58, %p59
    %p61 = scmp.ne.s32.totalorder %s49, %s50
    %p62 = scmp.eq.s32.totalorder %s19, 1
    %p63 = por %p61, %p62
    %p65 = scmp.ne.s32.totalorder %s50, %s64
    %p66 = scmp.eq.s32.totalorder %s19, 0
    %p67 = por %p65, %p66
    %s69 = sadd.s32 %s68, 1
    %p72 = scmp.eq.s32.totalorder %s13, 1
    %p73 = scmp.ne.s32.totalorder %s68, %s70
    %p74 = scmp.eq.s32.totalorder %s13, 0
    %p75 = por %p73, %p74
    %p76 = scmp.ne.s32.totalorder %s68, %s70
    %p77 = scmp.eq.s32.totalorder %s18, 1
    %p78 = por %p76, %p77
    %p79 = scmp.ne.s32.totalorder %s70, %s71
    %p80 = scmp.eq.s32.totalorder %s18, 0
    %p81 = por %p79, %p80
    %p82 = scmp.ne.s32.totalorder %s70, %s71
    %p83 = scmp.eq.s32.totalorder %s19, 1
    %p84 = por %p82, %p83
    %p86 = scmp.ne.s32.totalorder %s71, %s85
    %p87 = scmp.eq.s32.totalorder %s19, 0
    %p88 = por %p86, %p87
    %s90 = sadd.s32 %s89, 1
    %p93 = scmp.eq.s32.totalorder %s13, 1
    %p94 = scmp.ne.s32.totalorder %s89, %s91
    %p95 = scmp.eq.s32.totalorder %s13, 0
    %p96 = por %p94, %p95
    %p97 = scmp.ne.s32.totalorder %s89, %s91
    %p98 = scmp.eq.s32.totalorder %s18, 1
    %p99 = por %p97, %p98
    %p100 = scmp.ne.s32.totalorder %s91, %s92
    %p101 = scmp.eq.s32.totalorder %s18, 0
    %p102 = por %p100, %p101
    %p103 = scmp.ne.s32.totalorder %s91, %s92
    %p104 = scmp.eq.s32.totalorder %s19, 1
    %p105 = por %p103, %p104
    %p107 = scmp.ne.s32.totalorder %s92, %s106
    %p108 = scmp.eq.s32.totalorder %s19, 0
    %p109 = por %p107, %p108
    %s111 = sadd.s32 %s110, 1
    %p114 = scmp.eq.s32.totalorder %s13, 1
    %p115 = scmp.ne.s32.totalorder %s110, %s112
    %p116 = scmp.eq.s32.totalorder %s13, 0
    %p117 = por %p115, %p116
    %p118 = scmp.ne.s32.totalorder %s110, %s112
    %p119 = scmp.eq.s32.totalorder %s18, 1
    %p120 = por %p118, %p119
    %p121 = scmp.ne.s32.totalorder %s112, %s113
    %p122 = scmp.eq.s32.totalorder %s18, 0
    %p123 = por %p121, %p122
    %p124 = scmp.ne.s32.totalorder %s112, %s113
    %p125 = scmp.eq.s32.totalorder %s19, 1
    %p126 = por %p124, %p125
    %p128 = scmp.ne.s32.totalorder %s113, %s127
    %p129 = scmp.eq.s32.totalorder %s19, 0
    %p130 = por %p128, %p129
    %s132 = sadd.s32 %s131, 1
    %p135 = scmp.eq.s32.totalorder %s13, 1
    %p136 = scmp.ne.s32.totalorder %s131, %s133
    %p137 = scmp.eq.s32.totalorder %s13, 0
    %p138 = por %p136, %p137
    %p139 = scmp.ne.s32.totalorder %s131, %s133
    %p140 = scmp.eq.s32.totalorder %s18, 1
    %p141 = por %p139, %p140
    %p142 = scmp.ne.s32.totalorder %s133, %s134
    %p143 = scmp.eq.s32.totalorder %s18, 0
    %p144 = por %p142, %p143
    %p145 = scmp.ne.s32.totalorder %s133, %s134
    %p146 = scmp.eq.s32.totalorder %s19, 1
    %p147 = por %p145, %p146
    %p149 = scmp.ne.s32.totalorder %s134, %s148
    %p150 = scmp.eq.s32.totalorder %s19, 0
    %p151 = por %p149, %p150
    %s153 = sadd.s32 %s152, 1
    %p156 = scmp.eq.s32.totalorder %s13, 1
    %p157 = scmp.ne.s32.totalorder %s152, %s154
    %p158 = scmp.eq.s32.totalorder %s13, 0
    %p159 = por %p157, %p158
    %p160 = scmp.ne.s32.totalorder %s152, %s154
    %p161 = scmp.eq.s32.totalorder %s18, 1
    %p162 = por %p160, %p161
    %p163 = scmp.ne.s32.totalorder %s154, %s155
    %p164 = scmp.eq.s32.totalorder %s18, 0
    %p165 = por %p163, %p164
    %p166 = scmp.ne.s32.totalorder %s154, %s155
    %p167 = scmp.eq.s32.totalorder %s19, 1
    %p168 = por %p166, %p167
    %p170 = scmp.ne.s32.totalorder %s155, %s169
    %p171 = scmp.eq.s32.totalorder %s19, 0
    %p172 = por %p170, %p171
    %s173 = ssub.s32 %s13, %s20
    %p174 = scmp.eq.s32.totalorder %s173, 0
    %s176 = sadd.s32 %s175, 1
    %s177 = scalar_select %p174, %s175, %s176
    %p180 = pneg %p174
    %p181 = scmp.eq.s32.totalorder %s13, 1
    %p182 = por %p180, %p181
    %p183 = scmp.ne.s32.totalorder %s175, %s178
    %p184 = scmp.eq.s32.totalorder %s13, 0
    %p185 = por %p183, %p184
    %p186 = scmp.ne.s32.totalorder %s175, %s178
    %p187 = scmp.eq.s32.totalorder %s18, 1
    %p188 = por %p186, %p187
    %p189 = scmp.ne.s32.totalorder %s178, %s179
    %p190 = scmp.eq.s32.totalorder %s18, 0
    %p191 = por %p189, %p190
    %p192 = scmp.ne.s32.totalorder %s178, %s179
    %p193 = scmp.eq.s32.totalorder %s19, 1
    %p194 = por %p192, %p193
    %p196 = scmp.ne.s32.totalorder %s179, %s195
    %p197 = scmp.eq.s32.totalorder %s19, 0
    %p198 = por %p196, %p197
    %p199 = scmp.le.s32.totalorder 1, %s13
    %p200 = scmp.lt.s32.totalorder %s13, 3
    %p201 = pnand %p199, %p200
    %p202 = pneg %p201
    // Predicated region
    $region9: #{tpu_custom_call.1} parent=5 // pred_check
      _
    $region10: #{tpu_custom_call.1} parent=5 // pred_check_branch
      %204 = sbr.rel (%p201) target = $region12
    $region11: #{tpu_custom_call.1} parent=5 // pred_region
      %s205 = ssub.s32 %s13, 1
      // Predicated region
      $region13: #{tpu_custom_call.1} parent=11 // pred_check
        %p206 = pneg %p60
      $region14: #{tpu_custom_call.1} parent=11 // pred_check_branch
        %208 = sbr.rel (%p206) target = $region16
      $region15: #{tpu_custom_call.1} parent=11 // pred_region
        _
      $region16: #{tpu_custom_call.1} parent=11 // pred_fallthru
        _
      // Predicated region
      $region17: #{tpu_custom_call.1} parent=11 // pred_check
        %p209 = pneg %p81
      $region18: #{tpu_custom_call.1} parent=11 // pred_check_branch
        %211 = sbr.rel (%p209) target = $region20
      $region19: #{tpu_custom_call.1} parent=11 // pred_region
        _
      $region20: #{tpu_custom_call.1} parent=11 // pred_fallthru
        _
      // Predicated region
      $region21: #{tpu_custom_call.1} parent=11 // pred_check
        %p212 = pneg %p102
      $region22: #{tpu_custom_call.1} parent=11 // pred_check_branch
        %214 = sbr.rel (%p212) target = $region24
      $region23: #{tpu_custom_call.1} parent=11 // pred_region
        _
      $region24: #{tpu_custom_call.1} parent=11 // pred_fallthru
        _
      // Predicated region
      $region25: #{tpu_custom_call.1} parent=11 // pred_check
        %p215 = pneg %p123
      $region26: #{tpu_custom_call.1} parent=11 // pred_check_branch
        %217 = sbr.rel (%p215) target = $region28
      $region27: #{tpu_custom_call.1} parent=11 // pred_region
        _
      $region28: #{tpu_custom_call.1} parent=11 // pred_fallthru
        _
      // Predicated region
      $region29: #{tpu_custom_call.1} parent=11 // pred_check
        %p218 = pneg %p144
      $region30: #{tpu_custom_call.1} parent=11 // pred_check_branch
        %220 = sbr.rel (%p218) target = $region32
      $region31: #{tpu_custom_call.1} parent=11 // pred_region
        _
      $region32: #{tpu_custom_call.1} parent=11 // pred_fallthru
        _
      // Predicated region
      $region33: #{tpu_custom_call.1} parent=11 // pred_check
        %p221 = pneg %p165
      $region34: #{tpu_custom_call.1} parent=11 // pred_check_branch
        %223 = sbr.rel (%p221) target = $region36
      $region35: #{tpu_custom_call.1} parent=11 // pred_region
        _
      $region36: #{tpu_custom_call.1} parent=11 // pred_fallthru
        _
    $region12: #{tpu_custom_call.1} parent=5 // pred_fallthru
      _
    %p224 = scmp.lt.s32.totalorder %s13, 2
    // Predicated region
    $region37: #{tpu_custom_call.1} parent=5 // pred_check
      %p225 = pneg %p224
    $region38: #{tpu_custom_call.1} parent=5 // pred_check_branch
      %227 = sbr.rel (%p225) target = $region40
    $region39: #{tpu_custom_call.1} parent=5 // pred_region
      // Predicated region
      $region41: #{tpu_custom_call.1} parent=39 // pred_check
        %p228 = pneg %p33
      $region42: #{tpu_custom_call.1} parent=39 // pred_check_branch
        %230 = sbr.rel (%p228) target = $region44
      $region43: #{tpu_custom_call.1} parent=39 // pred_region
        %s231 = smul.u32 4, %s13
        %p232 = scmp.lt.s32.totalorder %s231, 7
        %s233 = scalar_select %p232, %s231, 7
        %s234 = smul.addr %s233, 8
        %s235 = scalar_lea.vmem %s0, %s234
        %s236 = smul.u32 4, %s13
      $region44: #{tpu_custom_call.1} parent=39 // pred_fallthru
        _
    $region40: #{tpu_custom_call.1} parent=5 // pred_fallthru
      _
    %p237 = scmp.le.s32.totalorder 1, %s13
    %p238 = scmp.lt.s32.totalorder %s13, 3
    %p239 = pnand %p237, %p238
    %p240 = pneg %p239
    // Predicated region
    $region45: #{tpu_custom_call.1} parent=5 // pred_check
      _
    $region46: #{tpu_custom_call.1} parent=5 // pred_check_branch
      %242 = sbr.rel (%p239) target = $region48
    $region47: #{tpu_custom_call.1} parent=5 // pred_region
      %s243 = ssub.s32 %s13, 1
      %s244 = smul.u32 4, %s18
      %p245 = scmp.lt.s32.totalorder %s244, 7
      %s246 = scalar_select %p245, %s244, 7
      %s247 = smul.addr %s246, 8
      %s248 = scalar_lea.vmem %s0, %s247
      %p249 = pneg %p39
      %p250 = pneg %p36
      %p251 = pneg %p60
      %p252 = pneg %p57
      %p253 = pneg %p81
      %p254 = pneg %p78
      %p255 = pneg %p102
      %p256 = pneg %p99
      %p257 = pneg %p123
      %p258 = pneg %p120
      %p259 = pneg %p144
      %p260 = pneg %p141
      %p261 = pneg %p165
      %p262 = pneg %p162
      %p263 = pneg %p191
      %p264 = pneg %p188
      %s265 = smul.u32 4, %s18
      %p266 = scmp.lt.s32.totalorder %s265, 7
      %s267 = scalar_select %p266, %s265, 7
      %s268 = smul.addr %s267, 8
      %s269 = scalar_lea.vmem %s7, %s268
      %s270 = smul.u32 4, %s18
      %p271 = scmp.lt.s32.totalorder %s270, 7
      %s272 = scalar_select %p271, %s270, 7
      %s273 = smul.addr %s272, 8
      %s274 = scalar_lea.vmem %s0, %s273
      %s275 = smul.u32 4, %s18
      %s276 = smul.u32 4, %s18
      %p277 = scmp.lt.s32.totalorder %s276, 7
      %s278 = scalar_select %p277, %s276, 7
      %s279 = smul.addr %s278, 8
      %s280 = scalar_lea.vmem %s7, %s279
      %s281 = smul.u32 4, %s18
      %v283 = vld [vmem:[%s274] sm:$0xff]
      %v284 = vld [vmem:[%s274 + $0x8] sm:$0xff]
      %v285 = vld [vmem:[%s274 + $0x10] sm:$0xff]
      %v286 = vld [vmem:[%s274 + $0x18] sm:$0xff]
      %v287 = vpack.c.bf16 %v284, %v283
      %v288 = vpack.c.bf16 %v286, %v285
      %v289 = vld [vmem:[%s1] sm:$0xf]
      %v290 = vld [vmem:[%s1 + $0x4] sm:$0xf]
      %v291 = vld [vmem:[%s2] sm:$0x1]
      %v293 = vlaneseq
      %v294 = vshrl.u32 %v293, 7
      %v295 = vsub.s32 0, %v294
      %v296 = vrot.slane %v291, %v295
      %v300 = vunpack.c.l.b16 %v289
      %v301 = vunpack.c.l.b16 %v290
      %v302 = vpack.c.b16 %v301, %v300
      %vm304 = vcmask 130048
      %v306 = vsel %vm304, %v287, 0
      %v309 = vsel %vm304, %v288, 0
      %311 = vmatprep.subr.bf16.mxu0 0
      %312 = vmatpush1.bf16.msra.mxu0 %v302
      %313 = vmatprep.subr.bf16.mxu0 0
      %314 = vmatpush1.bf16.msra.mxu0 0
      %315 = vmatprep.subr.bf16.mxu0 0
      %316 = vmatpush1.bf16.msra.mxu0 0
      %317 = vmatprep.subr.bf16.mxu0 0
      %318 = vmatpush1.bf16.msra.mxu0 0
      %319 = vmatprep.subr.bf16.mxu0 0
      %320 = vmatpush1.bf16.msra.mxu0 0
      %321 = vmatprep.subr.bf16.mxu0 0
      %322 = vmatpush1.bf16.msra.mxu0 0
      %323 = vmatprep.subr.bf16.mxu0 0
      %324 = vmatpush1.bf16.msra.mxu0 0
      %325 = vmatprep.subr.bf16.mxu0 0
      %326 = vmatpush1.bf16.msra.mxu0 0
      %327 = vmatprep.subr.bf16.mxu0 0
      %328 = vmatpush1.bf16.msra.mxu0 0
      %329 = vmatprep.subr.bf16.mxu0 0
      %330 = vmatpush1.bf16.msra.mxu0 0
      %331 = vmatprep.subr.bf16.mxu0 0
      %332 = vmatpush1.bf16.msra.mxu0 0
      %333 = vmatprep.subr.bf16.mxu0 0
      %334 = vmatpush1.bf16.msra.mxu0 0
      %335 = vmatprep.subr.bf16.mxu0 0
      %336 = vmatpush1.bf16.msra.mxu0 0
      %337 = vmatprep.subr.bf16.mxu0 0
      %338 = vmatpush1.bf16.msra.mxu0 0
      %339 = vmatprep.subr.bf16.mxu0 0
      %340 = vmatpush1.bf16.msra.mxu0 0
      %341 = vmatprep.subr.bf16.mxu0 0
      %342 = vmatpush1.bf16.msra.mxu0 0
      %343 = vmatprep.mubr.bf16.mxu0 0
      %344 = vmatmul.mubr.bf16.gmra.mrb[0].mxu0 %v306
      %v345 = vpop.f32.mrb[0].mxu0
      %v346 = vadd.f32 %v296, %v345
      %v347 = vpop.f32.mrb[0].mxu0
      %v348 = vpop.f32.mrb[0].mxu0
      %v349 = vadd.f32 %v296, %v348
      %v350 = vpop.f32.mrb[0].mxu0
      %351 = vmatprep.mubr.bf16.mxu0 0
      %352 = vmatmul.mubr.bf16.gmra.mrb[0].mxu0 %v309
      %v353 = vpop.f32.mrb[0].mxu0
      %v354 = vadd.f32 %v296, %v353
      %v355 = vpop.f32.mrb[0].mxu0
      %v356 = vpop.f32.mrb[0].mxu0
      %v357 = vadd.f32 %v296, %v356
      %v358 = vpop.f32.mrb[0].mxu0
      %359 = vdwg.mxu0
      %v360 = vmax.f32 %v346, 0.0
      %v361 = vmax.f32 %v349, 0.0
      %v362 = vmax.f32 %v354, 0.0
      %v363 = vmax.f32 %v357, 0.0
      %v364 = vpack.c.bf16 %v361, %v360
      %v365 = vpack.c.bf16 %v363, %v362
      %v366 = vld [vmem:[%s3] sm:$0xf]
      %v367 = vld [vmem:[%s3 + $0x4] sm:$0xf]
      %v368 = vld [vmem:[%s3 + $0x8] sm:$0xf]
      %v369 = vld [vmem:[%s3 + $0xc] sm:$0xf]
      %v370 = vld [vmem:[%s4] sm:$0x1]
      %v372 = vlaneseq
      %v373 = vshrl.u32 %v372, 7
      %v374 = vsub.s32 0, %v373
      %v375 = vrot.slane %v370, %v374
      %v381 = vunpack.c.l.b16 %v366
      %v382 = vunpack.c.l.b16 %v367
      %v383 = vunpack.c.l.b16 %v368
      %v384 = vunpack.c.l.b16 %v369
      %v385 = vpack.c.b16 %v382, %v381
      %v386 = vpack.c.b16 %v384, %v383
      %vm389 = vcmask 261120
      %v391 = vsel %vm389, %v364, 0
      %v394 = vsel %vm389, %v365, 0
      %396 = vmatprep.subr.bf16.mxu0 0
      %397 = vmatpush1.bf16.msra.mxu0 %v385
      %398 = vmatprep.subr.bf16.mxu0 0
      %399 = vmatpush1.bf16.msra.mxu0 %v386
      %400 = vmatprep.subr.bf16.mxu0 0
      %401 = vmatpush1.bf16.msra.mxu0 0
      %402 = vmatprep.subr.bf16.mxu0 0
      %403 = vmatpush1.bf16.msra.mxu0 0
      %404 = vmatprep.subr.bf16.mxu0 0
      %405 = vmatpush1.bf16.msra.mxu0 0
      %406 = vmatprep.subr.bf16.mxu0 0
      %407 = vmatpush1.bf16.msra.mxu0 0
      %408 = vmatprep.subr.bf16.mxu0 0
      %409 = vmatpush1.bf16.msra.mxu0 0
      %410 = vmatprep.subr.bf16.mxu0 0
      %411 = vmatpush1.bf16.msra.mxu0 0
      %412 = vmatprep.subr.bf16.mxu0 0
      %413 = vmatpush1.bf16.msra.mxu0 0
      %414 = vmatprep.subr.bf16.mxu0 0
      %415 = vmatpush1.bf16.msra.mxu0 0
      %416 = vmatprep.subr.bf16.mxu0 0
      %417 = vmatpush1.bf16.msra.mxu0 0
      %418 = vmatprep.subr.bf16.mxu0 0
      %419 = vmatpush1.bf16.msra.mxu0 0
      %420 = vmatprep.subr.bf16.mxu0 0
      %421 = vmatpush1.bf16.msra.mxu0 0
      %422 = vmatprep.subr.bf16.mxu0 0
      %423 = vmatpush1.bf16.msra.mxu0 0
      %424 = vmatprep.subr.bf16.mxu0 0
      %425 = vmatpush1.bf16.msra.mxu0 0
      %426 = vmatprep.subr.bf16.mxu0 0
      %427 = vmatpush1.bf16.msra.mxu0 0
      %428 = vmatprep.mubr.bf16.mxu0 0
      %429 = vmatmul.mubr.bf16.gmra.mrb[0].mxu0 %v391
      %v430 = vpop.f32.mrb[0].mxu0
      %v431 = vadd.f32 %v375, %v430
      %v432 = vpop.f32.mrb[0].mxu0
      %v433 = vpop.f32.mrb[0].mxu0
      %v434 = vadd.f32 %v375, %v433
      %v435 = vpop.f32.mrb[0].mxu0
      %436 = vmatprep.mubr.bf16.mxu0 0
      %437 = vmatmul.mubr.bf16.gmra.mrb[0].mxu0 %v394
      %v438 = vpop.f32.mrb[0].mxu0
      %v439 = vadd.f32 %v375, %v438
      %v440 = vpop.f32.mrb[0].mxu0
      %v441 = vpop.f32.mrb[0].mxu0
      %v442 = vadd.f32 %v375, %v441
      %v443 = vpop.f32.mrb[0].mxu0
      %444 = vdwg.mxu0
      %v445 = vmax.f32 %v431, 0.0
      %v446 = vmax.f32 %v434, 0.0
      %v447 = vmax.f32 %v439, 0.0
      %v448 = vmax.f32 %v442, 0.0
      %v449 = vpack.c.bf16 %v446, %v445
      %v450 = vpack.c.bf16 %v448, %v447
      %v451 = vld [vmem:[%s5] sm:$0xf]
      %v452 = vld [vmem:[%s5 + $0x4] sm:$0xf]
      %v453 = vld [vmem:[%s5 + $0x8] sm:$0xf]
      %v454 = vld [vmem:[%s5 + $0xc] sm:$0xf]
      %v455 = vld [vmem:[%s6] sm:$0x1]
      %v457 = vlaneseq
      %v458 = vshrl.u32 %v457, 7
      %v459 = vsub.s32 0, %v458
      %v460 = vrot.slane %v455, %v459
      %v466 = vunpack.c.l.b16 %v451
      %v467 = vunpack.c.l.b16 %v452
      %v468 = vunpack.c.l.b16 %v453
      %v469 = vunpack.c.l.b16 %v454
      %v470 = vpack.c.b16 %v467, %v466
      %v471 = vpack.c.b16 %v469, %v468
      %v475 = vsel %vm389, %v449, 0
      %v478 = vsel %vm389, %v450, 0
      %480 = vmatprep.subr.bf16.mxu0 0
      %481 = vmatpush1.bf16.msra.mxu0 %v470
      %482 = vmatprep.subr.bf16.mxu0 0
      %483 = vmatpush1.bf16.msra.mxu0 %v471
      %484 = vmatprep.subr.bf16.mxu0 0
      %485 = vmatpush1.bf16.msra.mxu0 0
      %486 = vmatprep.subr.bf16.mxu0 0
      %487 = vmatpush1.bf16.msra.mxu0 0
      %488 = vmatprep.subr.bf16.mxu0 0
      %489 = vmatpush1.bf16.msra.mxu0 0
      %490 = vmatprep.subr.bf16.mxu0 0
      %491 = vmatpush1.bf16.msra.mxu0 0
      %492 = vmatprep.subr.bf16.mxu0 0
      %493 = vmatpush1.bf16.msra.mxu0 0
      %494 = vmatprep.subr.bf16.mxu0 0
      %495 = vmatpush1.bf16.msra.mxu0 0
      %496 = vmatprep.subr.bf16.mxu0 0
      %497 = vmatpush1.bf16.msra.mxu0 0
      %498 = vmatprep.subr.bf16.mxu0 0
      %499 = vmatpush1.bf16.msra.mxu0 0
      %500 = vmatprep.subr.bf16.mxu0 0
      %501 = vmatpush1.bf16.msra.mxu0 0
      %502 = vmatprep.subr.bf16.mxu0 0
      %503 = vmatpush1.bf16.msra.mxu0 0
      %504 = vmatprep.subr.bf16.mxu0 0
      %505 = vmatpush1.bf16.msra.mxu0 0
      %506 = vmatprep.subr.bf16.mxu0 0
      %507 = vmatpush1.bf16.msra.mxu0 0
      %508 = vmatprep.subr.bf16.mxu0 0
      %509 = vmatpush1.bf16.msra.mxu0 0
      %510 = vmatprep.subr.bf16.mxu0 0
      %511 = vmatpush1.bf16.msra.mxu0 0
      %512 = vmatprep.mubr.bf16.mxu0 0
      %513 = vmatmul.mubr.bf16.gmra.mrb[0].mxu0 %v475
      %v514 = vpop.f32.mrb[0].mxu0
      %v515 = vadd.f32 %v460, %v514
      %v516 = vpop.f32.mrb[0].mxu0
      %v517 = vpop.f32.mrb[0].mxu0
      %v518 = vadd.f32 %v460, %v517
      %v519 = vpop.f32.mrb[0].mxu0
      %520 = vmatprep.mubr.bf16.mxu0 0
      %521 = vmatmul.mubr.bf16.gmra.mrb[0].mxu0 %v478
      %v522 = vpop.f32.mrb[0].mxu0
      %v523 = vadd.f32 %v460, %v522
      %v524 = vpop.f32.mrb[0].mxu0
      %v525 = vpop.f32.mrb[0].mxu0
      %v526 = vadd.f32 %v460, %v525
      %v527 = vpop.f32.mrb[0].mxu0
      %528 = vdwg.mxu0
      %vm529 = vcmask 64512
      %530 = vst.msk [vmem:[%s280] sm:$0xff] %vm529, %v515
      %531 = vst.msk [vmem:[%s280 + $0x8] sm:$0xff] %vm529, %v518
      %532 = vst.msk [vmem:[%s280 + $0x10] sm:$0xff] %vm529, %v523
      %533 = vst.msk [vmem:[%s280 + $0x18] sm:$0xff] %vm529, %v526
      %s534 = smul.u32 4, %s18
      %p535 = scmp.lt.s32.totalorder %s534, 7
      %s536 = scalar_select %p535, %s534, 7
      %s537 = smul.addr %s536, 8
      %s538 = scalar_lea.vmem %s7, %s537
      // Predicated region
      $region49: #{tpu_custom_call.1} parent=47 // pred_check
        %p539 = pneg %p188
      $region50: #{tpu_custom_call.1} parent=47 // pred_check_branch
        %541 = sbr.rel (%p539) target = $region52
      $region51: #{tpu_custom_call.1} parent=47 // pred_region
        %s542 = smul.u32 4, %s18
      $region52: #{tpu_custom_call.1} parent=47 // pred_fallthru
        _
    $region48: #{tpu_custom_call.1} parent=5 // pred_fallthru
      _
    %p543 = scmp.le.s32.totalorder 2, %s13
    // Predicated region
    $region53: #{tpu_custom_call.1} parent=5 // pred_check
      %p544 = pneg %p543
    $region54: #{tpu_custom_call.1} parent=5 // pred_check_branch
      %546 = sbr.rel (%p544) target = $region56
    $region55: #{tpu_custom_call.1} parent=5 // pred_region
      %s547 = ssub.s32 %s13, 2
      // Predicated region
      $region57: #{tpu_custom_call.1} parent=55 // pred_check
        %p548 = pneg %p194
      $region58: #{tpu_custom_call.1} parent=55 // pred_check_branch
        %550 = sbr.rel (%p548) target = $region60
      $region59: #{tpu_custom_call.1} parent=55 // pred_region
        %s551 = smul.u32 4, %s19
        %p552 = scmp.lt.s32.totalorder %s551, 7
        %s553 = scalar_select %p552, %s551, 7
        %s554 = smul.addr %s553, 8
        %s555 = scalar_lea.vmem %s7, %s554
      $region60: #{tpu_custom_call.1} parent=55 // pred_fallthru
        _
    $region56: #{tpu_custom_call.1} parent=5 // pred_fallthru
      _
  $region6: #{tpu_custom_call.1} parent=0 // loop_footer
    %s17 = sadd.s32 1, %s13
  $region7: #{tpu_custom_call.1} parent=0 // loop_footer_branch
    %12 = sbr.rel target = $region3
  $region8: #{tpu_custom_call.1} parent=0 // loop_exit
    _

</llo_original>
